<compile_context>
chip_gen: v7x
topology: tpu7x:2x2x1
jax: 0.10.0
libtpu: 0.0.40
codegen_flags: <defaults>
</compile_context>

<pallas_src>
import jax
import jax.numpy as jnp
from jax.experimental import pallas as pl
from jax.experimental.pallas import tpu as pltpu


_LANE = 128
_OUT_DTYPE = jnp.bfloat16  # f32 accumulate in-kernel; bf16 writeback


def _round_up(x, m):
    return (x + m - 1) // m * m


def _pick_tm(B):
    # Biggest row tile that keeps >= 2 grid steps (v7x megacore sharding),
    # capped at 1024 for v7x VMEM headroom; floor of 128 for sublane/MXU fill.
    for tm in (1024, 512, 256, 128):
        if B >= 2 * tm:
            return tm
    return 128


# ----------------------------- Pallas kernel --------------------------------
def _linear_kernel(x_ref, w_ref, b_ref, o_ref):
    # x_ref: (TM, K) f32      w_ref: (K, N_out) bf16 (pre-transposed at init)
    # b_ref: (1, N_out) f32   o_ref: (TM, N_out) bf16
    x = x_ref[...].astype(jnp.bfloat16)          # in-kernel cast, free VPU slot
    y = jnp.dot(x, w_ref[...], preferred_element_type=jnp.float32)
    o_ref[...] = (y + b_ref[...]).astype(o_ref.dtype)


@jax.jit
def pallas_linear(x, wt, bias2):
    """y = x @ wt + bias2, with wt already (K, N_out) bf16, bias2 (1, N_out) f32."""
    B, K = x.shape
    Kw, N_out = wt.shape
    if K < Kw:
        # Feature dim was padded at init (e.g. 1000 -> 1024); pad fuses under jit.
        x = jnp.pad(x, ((0, 0), (0, Kw - K)))

    tm = _pick_tm(B)
    grid = (pl.cdiv(B, tm),)   # ragged last block handled by Pallas masking

    return pl.pallas_call(
        _linear_kernel,
        out_shape=jax.ShapeDtypeStruct((B, N_out), _OUT_DTYPE),
        grid_spec=pl.GridSpec(
            grid=grid,
            in_specs=[
                pl.BlockSpec((tm, Kw), lambda i: (i, 0)),
                pl.BlockSpec((Kw, N_out), lambda i: (0, 0)),
                pl.BlockSpec((1, N_out), lambda i: (0, 0)),
            ],
            out_specs=pl.BlockSpec((tm, N_out), lambda i: (i, 0)),
        ),
        compiler_params=pltpu.CompilerParams(
            dimension_semantics=("parallel",),
        ),
    )(x, wt, bias2)


# ------------------------------ Module port ----------------------------------
class RandLA:
    """JAX/Pallas port of the reference PyTorch RandLA module."""

    def __init__(self, size=(1000, 6), key=None):
        if key is None:
            key = jax.random.PRNGKey(0)
        N = size[0]
        self.N = N
        kw, kb = jax.random.split(key)
        # PyTorch nn.Linear default init: U(-1/sqrt(fan_in), 1/sqrt(fan_in))
        bound = 1.0 / float(N) ** 0.5
        w = jax.random.uniform(kw, (N, N), jnp.float32, -bound, bound)
        b = jax.random.uniform(kb, (N,), jnp.float32, -bound, bound)
        # self.layers mirrors the reference ModuleList([nn.Linear(N, N)]),
        # keeping the f32 PyTorch-layout (N_out, N_in) params for reference.
        self.layers = [(w, b)]
        # Kernel-ready params, prepared ONCE at init (per perf review):
        # feature dims zero-padded to a multiple of 128, weight transposed to
        # (K, N_out) and cast to bf16, bias reshaped to (1, N_out) f32.
        Np = _round_up(N, _LANE)
        wt = jnp.zeros((Np, Np), jnp.float32).at[:N, :N].set(w.T)
        self._wt_bf16 = wt.astype(jnp.bfloat16)
        self._b2_f32 = jnp.zeros((1, Np), jnp.float32).at[0, :N].set(b)
        self._n_pad = Np

    def forward(self, x):
        # Reference forward: prints the input size and returns None.
        print(tuple(x.shape))
        # TODO(synk): reference forward performs no computation (body is `pass`);
        # the Linear layer below is exposed via apply_layer0 for the kernel demo.
        return None

    def apply_layer0(self, x):
        y = pallas_linear(x, self._wt_bf16, self._b2_f32)
        return y if self._n_pad == self.N else y[:, : self.N]

    def debug(self):
        pass


# --------------------------------- main --------------------------------------
if __name__ == "__main__":
    key = jax.random.PRNGKey(0)
    k_mod, k_x = jax.random.split(key)

    N = 128    # TPU-lane-aligned stand-in for the reference N=1000
    B = 256    # two 128-row tiles -> grid of 2, both v7x TCs get work
    model = RandLA(size=(N, 6), key=k_mod)

    x = jax.random.normal(k_x, (B, N), jnp.float32)

    # Faithful forward (prints size, returns None).
    _ = model.forward(x)

    # Run the Pallas kernel for the module's (otherwise unused) Linear layer.
    y = model.apply_layer0(x)
    y = jax.block_until_ready(y)

    # Cross-check against plain JAX on the same bf16-rounded operands / output.
    w, b = model.layers[0]
    x_bf = x.astype(jnp.bfloat16).astype(jnp.float32)
    w_bf = w.astype(jnp.bfloat16).astype(jnp.float32)
    y_ref = (x_bf @ w_bf.T + b).astype(jnp.bfloat16).astype(jnp.float32)
    assert jnp.allclose(y.astype(jnp.float32), y_ref, atol=5e-2, rtol=5e-2), \
        "mismatch vs reference"

    print("KERNEL_OK")
</pallas_src>

<mosaic_0001>
module attributes {stable_mosaic.version = 11 : i64} {
  func.func @_linear_kernel(%arg0: i32, %arg1: memref<128x128xf32, #tpu.memory_space<vmem>>, %arg2: memref<128x128xbf16, #tpu.memory_space<vmem>>, %arg3: memref<1x128xf32, #tpu.memory_space<vmem>>, %arg4: memref<128x128xbf16, #tpu.memory_space<vmem>>) attributes {dimension_semantics = [#tpu.dimension_semantics<parallel>], iteration_bounds = array<i64: 2>, scalar_prefetch = 0 : i64, scratch_operands = 0 : i64, tpu.core_type = #tpu.core_type<tc>, window_params = [{transform_indices = @transform_0, window_bounds = array<i64: 128, 128>}, {pipeline_mode = #tpu.pipeline_mode<synchronous>, transform_indices = @transform_1, window_bounds = array<i64: 128, 128>}, {pipeline_mode = #tpu.pipeline_mode<synchronous>, transform_indices = @transform_2, window_bounds = array<i64: 1, 128>}, {transform_indices = @transform_3, window_bounds = array<i64: 128, 128>}]} {
    %c0 = arith.constant 0 : index
    %c0_0 = arith.constant 0 : index
    %0 = vector.load %arg1[%c0, %c0_0] : memref<128x128xf32, #tpu.memory_space<vmem>>, vector<128x128xf32>
    %1 = arith.truncf %0 : vector<128x128xf32> to vector<128x128xbf16>
    %c0_1 = arith.constant 0 : index
    %c0_2 = arith.constant 0 : index
    %2 = vector.load %arg2[%c0_1, %c0_2] : memref<128x128xbf16, #tpu.memory_space<vmem>>, vector<128x128xbf16>
    %cst = arith.constant dense<0.000000e+00> : vector<128x128xf32>
    %3 = tpu.matmul %1, %2, %cst {dimension_numbers = #tpu.dot_dimension_numbers<[1], [0], [0], [1], [0, 0, 1, 1], [], []>} : vector<128x128xbf16>, vector<128x128xbf16>, vector<128x128xf32> -> vector<128x128xf32>
    %c0_3 = arith.constant 0 : index
    %c0_4 = arith.constant 0 : index
    %4 = vector.load %arg3[%c0_3, %c0_4] : memref<1x128xf32, #tpu.memory_space<vmem>>, vector<1x128xf32>
    %5 = vector.broadcast %4 : vector<1x128xf32> to vector<128x128xf32>
    %6 = arith.addf %3, %5 : vector<128x128xf32>
    %7 = arith.truncf %6 : vector<128x128xf32> to vector<128x128xbf16>
    %c0_5 = arith.constant 0 : index
    %c0_6 = arith.constant 0 : index
    %8 = vector.load %arg4[%c0_5, %c0_6] : memref<128x128xbf16, #tpu.memory_space<vmem>>, vector<128x128xbf16>
    tpu.vector_store %arg4[%c0_5, %c0_6], %7 {strides = array<i32>} : memref<128x128xbf16, #tpu.memory_space<vmem>>, vector<128x128xbf16>,
    return
  }
  func.func @transform_0(%arg0: i32) -> (i32, i32) {
    %c0_i32 = arith.constant 0 : i32
    %c0_i32_0 = arith.constant 0 : i32
    return %arg0, %c0_i32 : i32, i32
  }
  func.func @transform_1(%arg0: i32) -> (i32, i32) {
    %c0_i32 = arith.constant 0 : i32
    %c0_i32_0 = arith.constant 0 : i32
    %c0_i32_1 = arith.constant 0 : i32
    return %c0_i32, %c0_i32_0 : i32, i32
  }
  func.func @transform_2(%arg0: i32) -> (i32, i32) {
    %c0_i32 = arith.constant 0 : i32
    %c0_i32_0 = arith.constant 0 : i32
    %c0_i32_1 = arith.constant 0 : i32
    return %c0_i32, %c0_i32_0 : i32, i32
  }
  func.func @transform_3(%arg0: i32) -> (i32, i32) {
    %c0_i32 = arith.constant 0 : i32
    %c0_i32_0 = arith.constant 0 : i32
    return %arg0, %c0_i32 : i32, i32
  }
}

</mosaic_0001>

<llo_original>
// kernel: pallas_linear.1
$region0: #{pallas_linear.1}
  #allocation0 [shape = 'u32[]', space=smem, size = 0x4, offset = 0x4, fixed_abs, tag = 'smem constant byte address 0x4 - core index']
  #allocation1 [shape = 'u32[144,128]{1,0:T(1,128)}', space=vmem, size = 0x12000, scoped, tag = 'internal scratch']
  %s0 = inlined_call_operand.hbm [shape: f32[256,128], index: 0, kind: input, shape index: {}]
  %s1 = inlined_call_operand.hbm [shape: bf16[128,128], index: 1, kind: input, shape index: {}]
  %s2 = inlined_call_operand.vmem [shape: f32[1,128], index: 2, kind: input, shape index: {}]
  %s3 = inlined_call_operand.hbm [shape: bf16[256,128], index: 3, kind: output, shape index: {}]
  %s4 = sld [smem:[#allocation0]]
  $region53: #{pallas_linear.1} parent=0
    _
  %s6 = ssub.s32 1, %s4
  %s7 = scalar_select 0, %s6, %s4
  $region1: #{pallas_linear.1} parent=0
    #allocation2 [shape = 'u8[131072]{0}', space=vmem, size = 0x20000, scoped, tag = 'input window, operand 0']
    #allocation3 [shape = 's32[2]{0}', space=sflag, size = 0x8, scoped, tag = 'scoped memory for pallas_linear.1']
    #allocation4 [shape = 's32[2]{0}', space=sflag, size = 0x8, scoped, tag = 'scoped memory for pallas_linear.1']
    #allocation5 [shape = 'u8[32768]{0}', space=vmem, size = 0x8000, scoped, tag = 'input window, operand 1, single buffered']
    #allocation6 [shape = 's32[1]{0}', space=sflag, size = 0x4, scoped, tag = 'scoped memory for pallas_linear.1']
    #allocation7 [shape = 'u8[65536]{0}', space=vmem, size = 0x10000, scoped, tag = 'output window, operand 0']
    %8 = vsyncpa [#allocation3], 0
    %s9 = scalar_lea.sflag [#allocation3], 1
    %10 = vsyncpa %s9, 0
    %11 = vsyncpa [#allocation6], 0
    %12 = vsyncpa [#allocation4], 0
    %s13 = scalar_lea.sflag [#allocation4], 1
    %14 = vsyncpa %s13, 0
    loop: start=0, step=1, limit=4
    $region2: #{pallas_linear.1} parent=1 // loop_pre_header
      _
    $region3: #{pallas_linear.1} parent=1 // loop_header
      %s16 = sphi 0, %s20
      %p17 = scmp.ge.s32.totalorder %s16, 4
      %s26 = sphi 0, %s28
      %s29 = sphi 0, %s26
      %s30 = sphi 0, %s29
      %s46 = sphi 0, %s30
      %s50 = sphi 0, %s50
      %s52 = sphi 0, %s50
      %s53 = sphi 0, %s52
      %s67 = sphi 0, %s53
      %s71 = sphi 0, %s71
      %s73 = sphi 0, %s71
      %s74 = sphi 0, %s73
      %s88 = sphi 0, %s74
      %s94 = sphi 0, %s96
      %s97 = sphi 0, %s94
      %s98 = sphi 0, %s97
      %s114 = sphi 0, %s98
    $region4: #{pallas_linear.1} parent=1 // loop_header_branch
      %19 = sbr.rel (%p17) target = $region8
    $region5: #{pallas_linear.1} parent=1 // loop_body
      %s21 = ssub.s32 %s16, 1
      %s22 = ssub.s32 %s16, 2
      %s23 = sadd.s32 %s16, 1
      %s24 = ssub.s32 %s16, %s23
      %p25 = scmp.eq.s32.totalorder %s24, 0
      %s27 = sadd.s32 %s26, 1
      %s28 = scalar_select %p25, %s26, %s27
      %p31 = pneg %p25
      %p32 = scmp.eq.s32.totalorder %s16, 1
      %p33 = por %p31, %p32
      %p34 = scmp.ne.s32.totalorder %s26, %s29
      %p35 = scmp.eq.s32.totalorder %s16, 0
      %p36 = por %p34, %p35
      %p37 = scmp.ne.s32.totalorder %s26, %s29
      %p38 = scmp.eq.s32.totalorder %s21, 1
      %p39 = por %p37, %p38
      %p40 = scmp.ne.s32.totalorder %s29, %s30
      %p41 = scmp.eq.s32.totalorder %s21, 0
      %p42 = por %p40, %p41
      %p43 = scmp.ne.s32.totalorder %s29, %s30
      %p44 = scmp.eq.s32.totalorder %s22, 1
      %p45 = por %p43, %p44
      %p47 = scmp.ne.s32.totalorder %s30, %s46
      %p48 = scmp.eq.s32.totalorder %s22, 0
      %p49 = por %p47, %p48
      %s51 = sadd.s32 %s50, 1
      %p54 = scmp.eq.s32.totalorder %s16, 1
      %p55 = scmp.ne.s32.totalorder %s50, %s52
      %p56 = scmp.eq.s32.totalorder %s16, 0
      %p57 = por %p55, %p56
      %p58 = scmp.ne.s32.totalorder %s50, %s52
      %p59 = scmp.eq.s32.totalorder %s21, 1
      %p60 = por %p58, %p59
      %p61 = scmp.ne.s32.totalorder %s52, %s53
      %p62 = scmp.eq.s32.totalorder %s21, 0
      %p63 = por %p61, %p62
      %p64 = scmp.ne.s32.totalorder %s52, %s53
      %p65 = scmp.eq.s32.totalorder %s22, 1
      %p66 = por %p64, %p65
      %p68 = scmp.ne.s32.totalorder %s53, %s67
      %p69 = scmp.eq.s32.totalorder %s22, 0
      %p70 = por %p68, %p69
      %s72 = sadd.s32 %s71, 1
      %p75 = scmp.eq.s32.totalorder %s16, 1
      %p76 = scmp.ne.s32.totalorder %s71, %s73
      %p77 = scmp.eq.s32.totalorder %s16, 0
      %p78 = por %p76, %p77
      %p79 = scmp.ne.s32.totalorder %s71, %s73
      %p80 = scmp.eq.s32.totalorder %s21, 1
      %p81 = por %p79, %p80
      %p82 = scmp.ne.s32.totalorder %s73, %s74
      %p83 = scmp.eq.s32.totalorder %s21, 0
      %p84 = por %p82, %p83
      %p85 = scmp.ne.s32.totalorder %s73, %s74
      %p86 = scmp.eq.s32.totalorder %s22, 1
      %p87 = por %p85, %p86
      %p89 = scmp.ne.s32.totalorder %s74, %s88
      %p90 = scmp.eq.s32.totalorder %s22, 0
      %p91 = por %p89, %p90
      %s92 = ssub.s32 %s16, %s23
      %p93 = scmp.eq.s32.totalorder %s92, 0
      %s95 = sadd.s32 %s94, 1
      %s96 = scalar_select %p93, %s94, %s95
      %p99 = pneg %p93
      %p100 = scmp.eq.s32.totalorder %s16, 1
      %p101 = por %p99, %p100
      %p102 = scmp.ne.s32.totalorder %s94, %s97
      %p103 = scmp.eq.s32.totalorder %s16, 0
      %p104 = por %p102, %p103
      %p105 = scmp.ne.s32.totalorder %s94, %s97
      %p106 = scmp.eq.s32.totalorder %s21, 1
      %p107 = por %p105, %p106
      %p108 = scmp.ne.s32.totalorder %s97, %s98
      %p109 = scmp.eq.s32.totalorder %s21, 0
      %p110 = por %p108, %p109
      %p111 = scmp.ne.s32.totalorder %s97, %s98
      %p112 = scmp.eq.s32.totalorder %s22, 1
      %p113 = por %p111, %p112
      %p115 = scmp.ne.s32.totalorder %s98, %s114
      %p116 = scmp.eq.s32.totalorder %s22, 0
      %p117 = por %p115, %p116
      %p118 = scmp.le.s32.totalorder 1, %s16
      %p119 = scmp.lt.s32.totalorder %s16, 3
      %p120 = pnand %p118, %p119
      %p121 = pneg %p120
      // Predicated region
      $region9: #{pallas_linear.1} parent=5 // pred_check
        _
      $region10: #{pallas_linear.1} parent=5 // pred_check_branch
        %123 = sbr.rel (%p120) target = $region12
      $region11: #{pallas_linear.1} parent=5 // pred_region
        %s124 = ssub.s32 %s16, 1
        // Predicated region
        $region13: #{pallas_linear.1} parent=11 // pred_check
          %p125 = pneg %p63
        $region14: #{pallas_linear.1} parent=11 // pred_check_branch
          %127 = sbr.rel (%p125) target = $region16
        $region15: #{pallas_linear.1} parent=11 // pred_region
          %s129 = ssub.s32 1024, 1024
          %130 = vsyncadd [#allocation6], %s129
          %s131 = sshll.u32 [#allocation5], 4
          %s132 = int_to_ptr.vmem [resolvable:$true] %s131
          %137 = dma.hbm_to_vmem [thread:$0]  %s1, 1024, %s132, [#allocation6], 64, 64, 4
        $region16: #{pallas_linear.1} parent=11 // pred_fallthru
          _
        // Predicated region
        $region17: #{pallas_linear.1} parent=11 // pred_check
          %p138 = pneg %p84
        $region18: #{pallas_linear.1} parent=11 // pred_check_branch
          %140 = sbr.rel (%p138) target = $region20
        $region19: #{pallas_linear.1} parent=11 // pred_region
          _
        $region20: #{pallas_linear.1} parent=11 // pred_fallthru
          _
      $region12: #{pallas_linear.1} parent=5 // pred_fallthru
        _
      %p141 = scmp.lt.s32.totalorder %s16, 2
      // Predicated region
      $region21: #{pallas_linear.1} parent=5 // pred_check
        %p142 = pneg %p141
      $region22: #{pallas_linear.1} parent=5 // pred_check_branch
        %144 = sbr.rel (%p142) target = $region24
      $region23: #{pallas_linear.1} parent=5 // pred_region
        // Predicated region
        $region25: #{pallas_linear.1} parent=23 // pred_check
          %p145 = pneg %p36
        $region26: #{pallas_linear.1} parent=23 // pred_check_branch
          %147 = sbr.rel (%p145) target = $region28
        $region27: #{pallas_linear.1} parent=23 // pred_region
          %s148 = sand.u32 %s26, 1
          %s149 = scalar_lea.sflag [#allocation3], %s148
          %s150 = sand.u32 %s26, 1
          %s151 = smul.addr %s150, 128
          %s152 = scalar_lea.vmem [#allocation2], %s151
          %s153 = smul.u32 16, %s16
          %s155 = ssub.s32 2048, 2048
          %156 = vsyncadd %s149, %s155
          %s157 = smul.addr %s153, 128
          %s158 = scalar_lea.hbm %s0, %s157
          %s159 = sshll.u32 %s152, 4
          %s160 = int_to_ptr.vmem [resolvable:$true] %s159
          %165 = dma.hbm_to_vmem [thread:$0]  %s158, 2048, %s160, %s149, 128, 128, 8
        $region28: #{pallas_linear.1} parent=23 // pred_fallthru
          _
      $region24: #{pallas_linear.1} parent=5 // pred_fallthru
        _
      %p166 = scmp.le.s32.totalorder 1, %s16
      %p167 = scmp.lt.s32.totalorder %s16, 3
      %p168 = pnand %p166, %p167
      %p169 = pneg %p168
      // Predicated region
      $region29: #{pallas_linear.1} parent=5 // pred_check
        _
      $region30: #{pallas_linear.1} parent=5 // pred_check_branch
        %171 = sbr.rel (%p168) target = $region32
      $region31: #{pallas_linear.1} parent=5 // pred_region
        %s172 = ssub.s32 %s16, 1
        %s173 = sand.u32 %s29, 1
        %s174 = scalar_lea.sflag [#allocation3], %s173
        %s175 = sand.u32 %s29, 1
        %s176 = smul.addr %s175, 128
        %s177 = scalar_lea.vmem [#allocation2], %s176
        // Predicated region
        $region33: #{pallas_linear.1} parent=31 // pred_check
          %p178 = pneg %p42
        $region34: #{pallas_linear.1} parent=31 // pred_check_branch
          %180 = sbr.rel (%p178) target = $region36
        $region35: #{pallas_linear.1} parent=31 // pred_region
          %181 = dma.done %s174, 2048
        $region36: #{pallas_linear.1} parent=31 // pred_fallthru
          _
        // Predicated region
        $region37: #{pallas_linear.1} parent=31 // pred_check
          %p182 = pneg %p63
        $region38: #{pallas_linear.1} parent=31 // pred_check_branch
          %184 = sbr.rel (%p182) target = $region40
        $region39: #{pallas_linear.1} parent=31 // pred_region
          %185 = dma.done [#allocation6], 1024
        $region40: #{pallas_linear.1} parent=31 // pred_fallthru
          _
        %s186 = sand.u32 %s29, 1
        %s187 = scalar_lea.sflag [#allocation3], %s186
        %s188 = sand.u32 %s29, 1
        %s189 = smul.addr %s188, 128
        %s190 = scalar_lea.vmem [#allocation2], %s189
        %p191 = pneg %p42
        %p192 = pneg %p39
        %p193 = pneg %p63
        %p194 = pneg %p60
        %p195 = pneg %p84
        %p196 = pneg %p81
        %p197 = pneg %p110
        %p198 = pneg %p107
        %s199 = sand.u32 %s97, 1
        %s200 = scalar_lea.sflag [#allocation4], %s199
        %s201 = sand.u32 %s97, 1
        %s202 = smul.addr %s201, 64
        %s203 = scalar_lea.vmem [#allocation7], %s202
        %s204 = smul.u32 16, %s21
        %s205 = smul.u32 16, %s21
        %v207 = vld [vmem:[%s177] sm:$0xff]
        %v208 = vld [vmem:[%s177 + $0x8] sm:$0xff]
        %v209 = vld [vmem:[%s177 + $0x10] sm:$0xff]
        %v210 = vld [vmem:[%s177 + $0x18] sm:$0xff]
        %v211 = vld [vmem:[%s177 + $0x20] sm:$0xff]
        %v212 = vld [vmem:[%s177 + $0x28] sm:$0xff]
        %v213 = vld [vmem:[%s177 + $0x30] sm:$0xff]
        %v214 = vld [vmem:[%s177 + $0x38] sm:$0xff]
        %v215 = vld [vmem:[%s177 + $0x40] sm:$0xff]
        %v216 = vld [vmem:[%s177 + $0x48] sm:$0xff]
        %v217 = vld [vmem:[%s177 + $0x50] sm:$0xff]
        %v218 = vld [vmem:[%s177 + $0x58] sm:$0xff]
        %v219 = vld [vmem:[%s177 + $0x60] sm:$0xff]
        %v220 = vld [vmem:[%s177 + $0x68] sm:$0xff]
        %v221 = vld [vmem:[%s177 + $0x70] sm:$0xff]
        %v222 = vld [vmem:[%s177 + $0x78] sm:$0xff]
        %v223 = vpack.c.bf16 %v208, %v207
        %v224 = vpack.c.bf16 %v210, %v209
        %v225 = vpack.c.bf16 %v212, %v211
        %v226 = vpack.c.bf16 %v214, %v213
        %v227 = vpack.c.bf16 %v216, %v215
        %v228 = vpack.c.bf16 %v218, %v217
        %v229 = vpack.c.bf16 %v220, %v219
        %v230 = vpack.c.bf16 %v222, %v221
        %v231 = vld [vmem:[#allocation5] sm:$0xf]
        %v232 = vld [vmem:[#allocation5 + $0x4] sm:$0xf]
        %v233 = vld [vmem:[#allocation5 + $0x8] sm:$0xf]
        %v234 = vld [vmem:[#allocation5 + $0xc] sm:$0xf]
        %v235 = vld [vmem:[#allocation5 + $0x10] sm:$0xf]
        %v236 = vld [vmem:[#allocation5 + $0x14] sm:$0xf]
        %v237 = vld [vmem:[#allocation5 + $0x18] sm:$0xf]
        %v238 = vld [vmem:[#allocation5 + $0x1c] sm:$0xf]
        %v239 = vld [vmem:[#allocation5 + $0x20] sm:$0xf]
        %v240 = vld [vmem:[#allocation5 + $0x24] sm:$0xf]
        %v241 = vld [vmem:[#allocation5 + $0x28] sm:$0xf]
        %v242 = vld [vmem:[#allocation5 + $0x2c] sm:$0xf]
        %v243 = vld [vmem:[#allocation5 + $0x30] sm:$0xf]
        %v244 = vld [vmem:[#allocation5 + $0x34] sm:$0xf]
        %v245 = vld [vmem:[#allocation5 + $0x38] sm:$0xf]
        %v246 = vld [vmem:[#allocation5 + $0x3c] sm:$0xf]
        %v247 = vld [vmem:[%s2] sm:$0x1]
        %v249 = vlaneseq
        %v250 = vshrl.u32 %v249, 7
        %v251 = vsub.s32 0, %v250
        %v252 = vrot.slane %v247, %v251
        %v270 = vunpack.c.l.b16 %v231
        %v271 = vunpack.c.l.b16 %v232
        %v272 = vunpack.c.l.b16 %v233
        %v273 = vunpack.c.l.b16 %v234
        %v274 = vunpack.c.l.b16 %v235
        %v275 = vunpack.c.l.b16 %v236
        %v276 = vunpack.c.l.b16 %v237
        %v277 = vunpack.c.l.b16 %v238
        %v278 = vunpack.c.l.b16 %v239
        %v279 = vunpack.c.l.b16 %v240
        %v280 = vunpack.c.l.b16 %v241
        %v281 = vunpack.c.l.b16 %v242
        %v282 = vunpack.c.l.b16 %v243
        %v283 = vunpack.c.l.b16 %v244
        %v284 = vunpack.c.l.b16 %v245
        %v285 = vunpack.c.l.b16 %v246
        %v286 = vpack.c.b16 %v271, %v270
        %v287 = vpack.c.b16 %v273, %v272
        %v288 = vpack.c.b16 %v275, %v274
        %v289 = vpack.c.b16 %v277, %v276
        %v290 = vpack.c.b16 %v279, %v278
        %v291 = vpack.c.b16 %v281, %v280
        %v292 = vpack.c.b16 %v283, %v282
        %v293 = vpack.c.b16 %v285, %v284
        %302 = vmatprep.subr.bf16.mxu0 0
        %303 = vmatpush1.bf16.msra.mxu0 %v286
        %304 = vmatprep.subr.bf16.mxu0 0
        %305 = vmatpush1.bf16.msra.mxu0 %v287
        %306 = vmatprep.subr.bf16.mxu0 0
        %307 = vmatpush1.bf16.msra.mxu0 %v288
        %308 = vmatprep.subr.bf16.mxu0 0
        %309 = vmatpush1.bf16.msra.mxu0 %v289
        %310 = vmatprep.subr.bf16.mxu0 0
        %311 = vmatpush1.bf16.msra.mxu0 %v290
        %312 = vmatprep.subr.bf16.mxu0 0
        %313 = vmatpush1.bf16.msra.mxu0 %v291
        %314 = vmatprep.subr.bf16.mxu0 0
        %315 = vmatpush1.bf16.msra.mxu0 %v292
        %316 = vmatprep.subr.bf16.mxu0 0
        %317 = vmatpush1.bf16.msra.mxu0 %v293
        %318 = vmatprep.subr.bf16.mxu0 0
        %319 = vmatpush1.bf16.msra.mxu0 0
        %320 = vmatprep.subr.bf16.mxu0 0
        %321 = vmatpush1.bf16.msra.mxu0 0
        %322 = vmatprep.subr.bf16.mxu0 0
        %323 = vmatpush1.bf16.msra.mxu0 0
        %324 = vmatprep.subr.bf16.mxu0 0
        %325 = vmatpush1.bf16.msra.mxu0 0
        %326 = vmatprep.subr.bf16.mxu0 0
        %327 = vmatpush1.bf16.msra.mxu0 0
        %328 = vmatprep.subr.bf16.mxu0 0
        %329 = vmatpush1.bf16.msra.mxu0 0
        %330 = vmatprep.subr.bf16.mxu0 0
        %331 = vmatpush1.bf16.msra.mxu0 0
        %332 = vmatprep.subr.bf16.mxu0 0
        %333 = vmatpush1.bf16.msra.mxu0 0
        %334 = vmatprep.mubr.bf16.mxu0 0
        %335 = vmatmul.mubr.bf16.gmra.mrb[0].mxu0 %v223
        %v336 = vpop.f32.mrb[0].mxu0
        %v337 = vadd.f32 %v252, %v336
        %v338 = vpop.f32.mrb[0].mxu0
        %v339 = vpop.f32.mrb[0].mxu0
        %v340 = vadd.f32 %v252, %v339
        %v341 = vpop.f32.mrb[0].mxu0
        %342 = vmatprep.mubr.bf16.mxu0 0
        %343 = vmatmul.mubr.bf16.gmra.mrb[0].mxu0 %v224
        %v344 = vpop.f32.mrb[0].mxu0
        %v345 = vadd.f32 %v252, %v344
        %v346 = vpop.f32.mrb[0].mxu0
        %v347 = vpop.f32.mrb[0].mxu0
        %v348 = vadd.f32 %v252, %v347
        %v349 = vpop.f32.mrb[0].mxu0
        %350 = vmatprep.mubr.bf16.mxu0 0
        %351 = vmatmul.mubr.bf16.gmra.mrb[0].mxu0 %v225
        %v352 = vpop.f32.mrb[0].mxu0
        %v353 = vadd.f32 %v252, %v352
        %v354 = vpop.f32.mrb[0].mxu0
        %v355 = vpop.f32.mrb[0].mxu0
        %v356 = vadd.f32 %v252, %v355
        %v357 = vpop.f32.mrb[0].mxu0
        %358 = vmatprep.mubr.bf16.mxu0 0
        %359 = vmatmul.mubr.bf16.gmra.mrb[0].mxu0 %v226
        %v360 = vpop.f32.mrb[0].mxu0
        %v361 = vadd.f32 %v252, %v360
        %v362 = vpop.f32.mrb[0].mxu0
        %v363 = vpop.f32.mrb[0].mxu0
        %v364 = vadd.f32 %v252, %v363
        %v365 = vpop.f32.mrb[0].mxu0
        %366 = vmatprep.mubr.bf16.mxu0 0
        %367 = vmatmul.mubr.bf16.gmra.mrb[0].mxu0 %v227
        %v368 = vpop.f32.mrb[0].mxu0
        %v369 = vadd.f32 %v252, %v368
        %v370 = vpop.f32.mrb[0].mxu0
        %v371 = vpop.f32.mrb[0].mxu0
        %v372 = vadd.f32 %v252, %v371
        %v373 = vpop.f32.mrb[0].mxu0
        %374 = vmatprep.mubr.bf16.mxu0 0
        %375 = vmatmul.mubr.bf16.gmra.mrb[0].mxu0 %v228
        %v376 = vpop.f32.mrb[0].mxu0
        %v377 = vadd.f32 %v252, %v376
        %v378 = vpop.f32.mrb[0].mxu0
        %v379 = vpop.f32.mrb[0].mxu0
        %v380 = vadd.f32 %v252, %v379
        %v381 = vpop.f32.mrb[0].mxu0
        %382 = vmatprep.mubr.bf16.mxu0 0
        %383 = vmatmul.mubr.bf16.gmra.mrb[0].mxu0 %v229
        %v384 = vpop.f32.mrb[0].mxu0
        %v385 = vadd.f32 %v252, %v384
        %v386 = vpop.f32.mrb[0].mxu0
        %v387 = vpop.f32.mrb[0].mxu0
        %v388 = vadd.f32 %v252, %v387
        %v389 = vpop.f32.mrb[0].mxu0
        %390 = vmatprep.mubr.bf16.mxu0 0
        %391 = vmatmul.mubr.bf16.gmra.mrb[0].mxu0 %v230
        %v392 = vpop.f32.mrb[0].mxu0
        %v393 = vadd.f32 %v252, %v392
        %v394 = vpop.f32.mrb[0].mxu0
        %v395 = vpop.f32.mrb[0].mxu0
        %v396 = vadd.f32 %v252, %v395
        %v397 = vpop.f32.mrb[0].mxu0
        %398 = vdwg.mxu0
        %v399 = vpack.c.bf16 %v340, %v337
        %v400 = vpack.c.bf16 %v348, %v345
        %v401 = vpack.c.bf16 %v356, %v353
        %v402 = vpack.c.bf16 %v364, %v361
        %v403 = vpack.c.bf16 %v372, %v369
        %v404 = vpack.c.bf16 %v380, %v377
        %v405 = vpack.c.bf16 %v388, %v385
        %v406 = vpack.c.bf16 %v396, %v393
        %v415 = vunpack.c.l.b16 %v399
        %v416 = vunpack.c.h.b16 %v399
        %v417 = vunpack.c.l.b16 %v400
        %v418 = vunpack.c.h.b16 %v400
        %v419 = vunpack.c.l.b16 %v401
        %v420 = vunpack.c.h.b16 %v401
        %v421 = vunpack.c.l.b16 %v402
        %v422 = vunpack.c.h.b16 %v402
        %v423 = vunpack.c.l.b16 %v403
        %v424 = vunpack.c.h.b16 %v403
        %v425 = vunpack.c.l.b16 %v404
        %v426 = vunpack.c.h.b16 %v404
        %v427 = vunpack.c.l.b16 %v405
        %v428 = vunpack.c.h.b16 %v405
        %v429 = vunpack.c.l.b16 %v406
        %v430 = vunpack.c.h.b16 %v406
        %v431 = vpack.c.b16 %v415, %v415
        %v432 = vpack.c.b16 %v416, %v416
        %v433 = vpack.c.b16 %v417, %v417
        %v434 = vpack.c.b16 %v418, %v418
        %v435 = vpack.c.b16 %v419, %v419
        %v436 = vpack.c.b16 %v420, %v420
        %v437 = vpack.c.b16 %v421, %v421
        %v438 = vpack.c.b16 %v422, %v422
        %v439 = vpack.c.b16 %v423, %v423
        %v440 = vpack.c.b16 %v424, %v424
        %v441 = vpack.c.b16 %v425, %v425
        %v442 = vpack.c.b16 %v426, %v426
        %v443 = vpack.c.b16 %v427, %v427
        %v444 = vpack.c.b16 %v428, %v428
        %v445 = vpack.c.b16 %v429, %v429
        %v446 = vpack.c.b16 %v430, %v430
        %463 = vst [vmem:[%s203] sm:$0xf] %v431
        %464 = vst [vmem:[%s203 + $0x4] sm:$0xf] %v432
        %465 = vst [vmem:[%s203 + $0x8] sm:$0xf] %v433
        %466 = vst [vmem:[%s203 + $0xc] sm:$0xf] %v434
        %467 = vst [vmem:[%s203 + $0x10] sm:$0xf] %v435
        %468 = vst [vmem:[%s203 + $0x14] sm:$0xf] %v436
        %469 = vst [vmem:[%s203 + $0x18] sm:$0xf] %v437
        %470 = vst [vmem:[%s203 + $0x1c] sm:$0xf] %v438
        %471 = vst [vmem:[%s203 + $0x20] sm:$0xf] %v439
        %472 = vst [vmem:[%s203 + $0x24] sm:$0xf] %v440
        %473 = vst [vmem:[%s203 + $0x28] sm:$0xf] %v441
        %474 = vst [vmem:[%s203 + $0x2c] sm:$0xf] %v442
        %475 = vst [vmem:[%s203 + $0x30] sm:$0xf] %v443
        %476 = vst [vmem:[%s203 + $0x34] sm:$0xf] %v444
        %477 = vst [vmem:[%s203 + $0x38] sm:$0xf] %v445
        %478 = vst [vmem:[%s203 + $0x3c] sm:$0xf] %v446
        %s479 = sand.u32 %s97, 1
        %s480 = scalar_lea.sflag [#allocation4], %s479
        %s481 = sand.u32 %s97, 1
        %s482 = smul.addr %s481, 64
        %s483 = scalar_lea.vmem [#allocation7], %s482
        // Predicated region
        $region41: #{pallas_linear.1} parent=31 // pred_check
          %p484 = pneg %p107
        $region42: #{pallas_linear.1} parent=31 // pred_check_branch
          %486 = sbr.rel (%p484) target = $region44
        $region43: #{pallas_linear.1} parent=31 // pred_region
          %s487 = smul.u32 16, %s21
          %s489 = ssub.s32 1024, 1024
          %490 = vsyncadd %s480, %s489
          %s491 = smul.addr %s487, 64
          %s492 = scalar_lea.hbm %s3, %s491
          %s493 = sshll.u32 %s483, 4
          %s494 = int_to_ptr.vmem [resolvable:$true] %s493
          %499 = dma.vmem_to_hbm [thread:$0]  %s494, 1024, %s492, %s480, 64, 64, 4
        $region44: #{pallas_linear.1} parent=31 // pred_fallthru
          _
      $region32: #{pallas_linear.1} parent=5 // pred_fallthru
        _
      %p500 = scmp.le.s32.totalorder 2, %s16
      // Predicated region
      $region45: #{pallas_linear.1} parent=5 // pred_check
        %p501 = pneg %p500
      $region46: #{pallas_linear.1} parent=5 // pred_check_branch
        %503 = sbr.rel (%p501) target = $region48
      $region47: #{pallas_linear.1} parent=5 // pred_region
        %s504 = ssub.s32 %s16, 2
        // Predicated region
        $region49: #{pallas_linear.1} parent=47 // pred_check
          %p505 = pneg %p113
        $region50: #{pallas_linear.1} parent=47 // pred_check_branch
          %507 = sbr.rel (%p505) target = $region52
        $region51: #{pallas_linear.1} parent=47 // pred_region
          %s508 = sand.u32 %s98, 1
          %s509 = scalar_lea.sflag [#allocation4], %s508
          %s510 = sand.u32 %s98, 1
          %s511 = smul.addr %s510, 64
          %s512 = scalar_lea.vmem [#allocation7], %s511
          %513 = dma.done %s509, 1024
        $region52: #{pallas_linear.1} parent=47 // pred_fallthru
          _
      $region48: #{pallas_linear.1} parent=5 // pred_fallthru
        _
    $region6: #{pallas_linear.1} parent=1 // loop_footer
      %s20 = sadd.s32 1, %s16
    $region7: #{pallas_linear.1} parent=1 // loop_footer_branch
      %15 = sbr.rel target = $region3
    $region8: #{pallas_linear.1} parent=1 // loop_exit
      _
    %514 = vsyncpa [#allocation3], 1
    %s515 = scalar_lea.sflag [#allocation3], 1
    %516 = vsyncpa %s515, 1
    %517 = vsyncpa [#allocation6], 1
    %518 = vsyncpa [#allocation4], 1
    %s519 = scalar_lea.sflag [#allocation4], 1
    %520 = vsyncpa %s519, 1

</llo_original>
